<compile_context>
chip_gen: v7x
topology: tpu7x:2x2x1
jax: 0.10.0
libtpu: 0.0.40
codegen_flags: <defaults>
</compile_context>

<pallas_src>
import functools
import math

import jax
import jax.numpy as jnp
from jax.experimental import pallas as pl
from jax.experimental.pallas import tpu as pltpu


def _gate_kernel(m_ref, w1_ref, b1_ref, w2_ref, b2_ref, o_ref, *, C):
    # m_ref : (F, W)      time-mean slab, column index = b*C + c (W = BC tile)
    # w1_ref: (3, F, F)   conv1 taps, taps-first, bf16
    # b1_ref: (F, 1)      f32
    # w2_ref: (3, K, F)   conv2 taps, taps-first, bf16
    # b2_ref: (K, 1)      f32
    # o_ref : (K, W)      lane-dense output slab
    f32 = jnp.float32
    bf16 = jnp.bfloat16

    m = m_ref[...].astype(f32)                           # (F, W)
    F_, W = m.shape

    # Batch-boundary masks, built ONCE at full width and reused by both convs.
    # (Tile width is a multiple of C, so local column index % C == global c.)
    cmod = jax.lax.broadcasted_iota(jnp.int32, (F_, W), 1) % C
    mask_prev = (cmod != 0).astype(f32)                  # column c has in-batch c-1
    mask_next = (cmod != (C - 1)).astype(f32)            # column c has in-batch c+1

    zcol = jnp.zeros((F_, 1), f32)

    def shifted(a):
        # a_prev[:, c] = a[:, c-1], a_next[:, c] = a[:, c+1]; zero across batch edges.
        a_prev = jnp.concatenate([zcol, a[:, : W - 1]], axis=1) * mask_prev
        a_next = jnp.concatenate([a[:, 1:], zcol], axis=1) * mask_next
        return a_prev, a_next

    def conv3(a, a_prev, a_next, w_ref, b_ref):
        # 3-tap Conv1d over C as three accumulating MXU dots (no im2col buffer).
        # Torch Conv1d taps: k=0 -> c-1, k=1 -> c, k=2 -> c+1.
        acc = jnp.dot(w_ref[0], a_prev.astype(bf16), preferred_element_type=f32)
        acc = acc + jnp.dot(w_ref[1], a.astype(bf16), preferred_element_type=f32)
        acc = acc + jnp.dot(w_ref[2], a_next.astype(bf16), preferred_element_type=f32)
        return acc + b_ref[...]                          # (Fout, W) f32

    # Conv1d #1 (F -> F) + bias, ReLU.
    m_prev, m_next = shifted(m)
    h = jnp.maximum(conv3(m, m_prev, m_next, w1_ref, b1_ref), 0.0)   # (F, W)

    # Conv1d #2 (F -> K) + bias.
    h_prev, h_next = shifted(h)
    y = conv3(h, h_prev, h_next, w2_ref, b2_ref)                     # (K, W)

    o_ref[...] = y.astype(o_ref.dtype)


def prepare_gate_params(w1, b1, w2, b2):
    """One-time repack of the PyTorch Conv1d params (hoisted off the forward path).

    w1: (F, F, 3), b1: (F,), w2: (K, F, 3), b2: (K,)  [torch Conv1d (out, in, k)].
    Returns taps-first bf16 weights and column-vector f32 biases.
    """
    w1k = jnp.transpose(w1, (2, 0, 1)).astype(jnp.bfloat16)   # (3, F, F)
    w2k = jnp.transpose(w2, (2, 0, 1)).astype(jnp.bfloat16)   # (3, K, F)
    b1c = b1.reshape(-1, 1).astype(jnp.float32)               # (F, 1)
    b2c = b2.reshape(-1, 1).astype(jnp.float32)               # (K, 1)
    return w1k, b1c, w2k, b2c


def _choose_bc_tile(BC, C, target=2048):
    """Lane tile along B*C: a multiple of C (so taps/masks never cross a block edge,
    no halo) and, at production sizes, a multiple of 256 lanes (MXU N width on
    v6e/v7x; also /128 for v5e).  Per-block working set ~10*F*tile*4 B — far below
    VMEM limits (including v7x's 64 MiB) even double-buffered."""
    if BC <= target:
        return BC
    quantum = math.lcm(C, 256)
    tile = (target // quantum) * quantum
    if tile == 0:
        tile = quantum
    return min(tile, BC)


def channel_freq_gate(x, params):
    """x: (B, C, F, T); params from prepare_gate_params(). Returns (B, 1, C, K, 1)."""
    w1k, b1c, w2k, b2c = params
    B, C, F, T = x.shape
    K = w2k.shape[1]
    BC = B * C

    # Time mean in the wrapper (XLA fuses it; accumulate in f32 even for bf16 x),
    # laid out lane-dense as (F, B*C) with column index = b*C + c.
    m = jnp.mean(x.astype(jnp.float32), axis=3)            # (B, C, F)
    m = jnp.transpose(m, (2, 0, 1)).reshape(F, BC)         # (F, B*C)

    tile = _choose_bc_tile(BC, C)
    grid = (pl.cdiv(BC, tile),)

    out = pl.pallas_call(
        functools.partial(_gate_kernel, C=C),
        out_shape=jax.ShapeDtypeStruct((K, BC), jnp.float32),
        grid_spec=pltpu.PrefetchScalarGridSpec(
            num_scalar_prefetch=0,
            grid=grid,
            in_specs=[
                pl.BlockSpec((F, tile), lambda i: (0, i)),        # m slab (tiled on B*C)
                pl.BlockSpec((3, F, F), lambda i: (0, 0, 0)),     # conv1 taps (bf16)
                pl.BlockSpec((F, 1), lambda i: (0, 0)),           # conv1 bias
                pl.BlockSpec((3, K, F), lambda i: (0, 0, 0)),     # conv2 taps (bf16)
                pl.BlockSpec((K, 1), lambda i: (0, 0)),           # conv2 bias
            ],
            out_specs=pl.BlockSpec((K, tile), lambda i: (0, i)),  # lane-dense output
        ),
        compiler_params=pltpu.CompilerParams(
            dimension_semantics=("parallel",)),
        cost_estimate=pl.CostEstimate(
            flops=2 * BC * 3 * F * (F + K),
            transcendentals=0,
            bytes_accessed=(BC * F + BC * K + F + K) * 4
                           + (3 * F * F + 3 * K * F) * 2),
    )(m, w1k, b1c, w2k, b2c)

    # (K, B*C) -> (B, C, K) -> (B, 1, C, K, 1)
    out = jnp.transpose(out.reshape(K, B, C), (1, 2, 0))
    return out[:, None, :, :, None]


def _ref_forward(x, w1, b1, w2, b2):
    """Pure-JAX reference mirroring the PyTorch forward (f32 throughout)."""
    m = jnp.mean(x, axis=3)                 # (B, C, F)
    m = jnp.transpose(m, (0, 2, 1))         # (B, F, C)

    def conv1d(inp, w, b):
        out = jax.lax.conv_general_dilated(
            inp, w, window_strides=(1,), padding=((1, 1),),
            dimension_numbers=("NCH", "OIH", "NCH"))
        return out + b[None, :, None]

    h = jax.nn.relu(conv1d(m, w1, b1))      # (B, F, C)
    y = conv1d(h, w2, b2)                   # (B, K, C)
    y = jnp.transpose(y, (0, 2, 1))         # (B, C, K)
    return y[:, None, :, :, None]           # (B, 1, C, K, 1)


def _kaiming_normal_fan_out(key, shape):
    # Conv1d weight (out, in, k): fan_out = out * k; gain for relu = sqrt(2).
    out_ch, _, ksz = shape
    fan_out = out_ch * ksz
    std = (2.0 / fan_out) ** 0.5
    return std * jax.random.normal(key, shape, dtype=jnp.float32)


if __name__ == "__main__":
    B, C, F, T = 2, 16, 8, 10   # batch, channels (conv sequence length), freq_len, time
    K = 4                       # `kernel` (conv2 output channels)

    key = jax.random.PRNGKey(0)
    kx, k1, k2, kb1, kb2 = jax.random.split(key, 5)

    x = jax.random.normal(kx, (B, C, F, T), dtype=jnp.float32)

    # Weights use the module's kaiming fan_out init; small nonzero biases so the
    # bias path is actually exercised (module init is zero, but biases are learnable).
    w1 = _kaiming_normal_fan_out(k1, (F, F, 3))
    b1 = 0.1 * jax.random.normal(kb1, (F,), dtype=jnp.float32)
    w2 = _kaiming_normal_fan_out(k2, (K, F, 3))
    b2 = 0.1 * jax.random.normal(kb2, (K,), dtype=jnp.float32)

    params = prepare_gate_params(w1, b1, w2, b2)   # hoisted one-time repack
    out = channel_freq_gate(x, params)
    out = jax.block_until_ready(out)

    ref = _ref_forward(x, w1, b1, w2, b2)
    assert out.shape == (B, 1, C, K, 1), out.shape
    max_err = float(jnp.max(jnp.abs(out - ref)))
    # bf16 MXU operands with f32 accumulation -> loosened tolerance vs. f32 reference.
    assert max_err < 5e-2, max_err
    print("KERNEL_OK")
</pallas_src>

<mosaic_0001>
module attributes {stable_mosaic.version = 11 : i64} {
  func.func @_gate_kernel(%arg0: i32, %arg1: memref<8x32xf32, #tpu.memory_space<vmem>>, %arg2: memref<3x8x8xbf16, #tpu.memory_space<vmem>>, %arg3: memref<8x1xf32, #tpu.memory_space<vmem>>, %arg4: memref<3x4x8xbf16, #tpu.memory_space<vmem>>, %arg5: memref<4x1xf32, #tpu.memory_space<vmem>>, %arg6: memref<4x32xf32, #tpu.memory_space<vmem>>) attributes {dimension_semantics = [#tpu.dimension_semantics<parallel>], iteration_bounds = array<i64: 1>, scalar_prefetch = 0 : i64, scratch_operands = 0 : i64, tpu.core_type = #tpu.core_type<tc>, window_params = [{transform_indices = @transform_0, window_bounds = array<i64: 8, 32>}, {pipeline_mode = #tpu.pipeline_mode<synchronous>, transform_indices = @transform_1, window_bounds = array<i64: 3, 8, 8>}, {pipeline_mode = #tpu.pipeline_mode<synchronous>, transform_indices = @transform_2, window_bounds = array<i64: 8, 1>}, {pipeline_mode = #tpu.pipeline_mode<synchronous>, transform_indices = @transform_3, window_bounds = array<i64: 3, 4, 8>}, {pipeline_mode = #tpu.pipeline_mode<synchronous>, transform_indices = @transform_4, window_bounds = array<i64: 4, 1>}, {transform_indices = @transform_5, window_bounds = array<i64: 4, 32>}]} {
    %c0 = arith.constant 0 : index
    %c0_0 = arith.constant 0 : index
    %0 = vector.load %arg1[%c0, %c0_0] : memref<8x32xf32, #tpu.memory_space<vmem>>, vector<8x32xf32>
    %1 = tpu.iota {dimensions = array<i32: 1>} : vector<8x32xi32>
    %c16_i32 = arith.constant 16 : i32
    %c0_i32 = arith.constant 0 : i32
    %2 = arith.cmpi eq, %c16_i32, %c0_i32 : i32
    %c1_i32 = arith.constant 1 : i32
    %3 = arith.select %2, %c1_i32, %c16_i32 : i32
    %4 = vector.broadcast %3 : i32 to vector<8x32xi32>
    %5 = arith.remsi %1, %4 : vector<8x32xi32>
    %c0_i32_1 = arith.constant 0 : i32
    %6 = vector.broadcast %c0_i32_1 : i32 to vector<8x32xi32>
    %7 = arith.cmpi ne, %5, %6 : vector<8x32xi32>
    %c0_i32_2 = arith.constant 0 : i32
    %8 = vector.broadcast %c0_i32_2 : i32 to vector<8x32xi32>
    %9 = arith.cmpi slt, %5, %8 : vector<8x32xi32>
    %c0_i32_3 = arith.constant 0 : i32
    %10 = arith.cmpi slt, %3, %c0_i32_3 : i32
    %11 = vector.broadcast %10 : i1 to vector<8x32xi1>
    %12 = vector.broadcast %11 : vector<8x32xi1> to vector<8x32xi1>
    %13 = arith.xori %9, %12 : vector<8x32xi1>
    %14 = arith.andi %13, %7 : vector<8x32xi1>
    %15 = vector.broadcast %3 : i32 to vector<8x32xi32>
    %16 = arith.addi %5, %15 : vector<8x32xi32>
    %17 = arith.select %14, %16, %5 : vector<8x32xi1>, vector<8x32xi32>
    %c0_i32_4 = arith.constant 0 : i32
    %18 = vector.broadcast %c0_i32_4 : i32 to vector<8x32xi32>
    %19 = arith.cmpi ne, %17, %18 : vector<8x32xi32>
    %20 = arith.extui %19 : vector<8x32xi1> to vector<8x32xi32>
    %21 = arith.sitofp %20 : vector<8x32xi32> to vector<8x32xf32>
    %c15_i32 = arith.constant 15 : i32
    %22 = vector.broadcast %c15_i32 : i32 to vector<8x32xi32>
    %23 = arith.cmpi ne, %17, %22 : vector<8x32xi32>
    %24 = arith.extui %23 : vector<8x32xi1> to vector<8x32xi32>
    %25 = arith.sitofp %24 : vector<8x32xi32> to vector<8x32xf32>
    %cst = arith.constant 0.000000e+00 : f32
    %26 = vector.broadcast %cst : f32 to vector<8x1xf32>
    %27 = vector.extract_strided_slice %0 {offsets = [0, 0], sizes = [8, 31], strides = [1, 1]} : vector<8x32xf32> to vector<8x31xf32>
    %28 = tpu.concatenate %26, %27 in 1 : vector<8x1xf32>, vector<8x31xf32> -> vector<8x32xf32>
    %29 = arith.mulf %28, %21 : vector<8x32xf32>
    %30 = vector.extract_strided_slice %0 {offsets = [0, 1], sizes = [8, 31], strides = [1, 1]} : vector<8x32xf32> to vector<8x31xf32>
    %31 = tpu.concatenate %30, %26 in 1 : vector<8x31xf32>, vector<8x1xf32> -> vector<8x32xf32>
    %32 = arith.mulf %31, %25 : vector<8x32xf32>
    %c0_5 = arith.constant 0 : index
    %c0_6 = arith.constant 0 : index
    %c0_7 = arith.constant 0 : index
    %33 = vector.load %arg2[%c0_5, %c0_6, %c0_7] : memref<3x8x8xbf16, #tpu.memory_space<vmem>>, vector<1x8x8xbf16>
    %34 = vector.shape_cast %33 : vector<1x8x8xbf16> to vector<8x8xbf16>
    %35 = arith.truncf %29 : vector<8x32xf32> to vector<8x32xbf16>
    %cst_8 = arith.constant dense<0.000000e+00> : vector<8x32xf32>
    %36 = tpu.matmul %34, %35, %cst_8 {dimension_numbers = #tpu.dot_dimension_numbers<[1], [0], [0], [1], [0, 0, 1, 1], [], []>} : vector<8x8xbf16>, vector<8x32xbf16>, vector<8x32xf32> -> vector<8x32xf32>
    %c1 = arith.constant 1 : index
    %c0_9 = arith.constant 0 : index
    %c0_10 = arith.constant 0 : index
    %37 = vector.load %arg2[%c1, %c0_9, %c0_10] : memref<3x8x8xbf16, #tpu.memory_space<vmem>>, vector<1x8x8xbf16>
    %38 = vector.shape_cast %37 : vector<1x8x8xbf16> to vector<8x8xbf16>
    %39 = arith.truncf %0 : vector<8x32xf32> to vector<8x32xbf16>
    %cst_11 = arith.constant dense<0.000000e+00> : vector<8x32xf32>
    %40 = tpu.matmul %38, %39, %cst_11 {dimension_numbers = #tpu.dot_dimension_numbers<[1], [0], [0], [1], [0, 0, 1, 1], [], []>} : vector<8x8xbf16>, vector<8x32xbf16>, vector<8x32xf32> -> vector<8x32xf32>
    %41 = arith.addf %36, %40 : vector<8x32xf32>
    %c2 = arith.constant 2 : index
    %c0_12 = arith.constant 0 : index
    %c0_13 = arith.constant 0 : index
    %42 = vector.load %arg2[%c2, %c0_12, %c0_13] : memref<3x8x8xbf16, #tpu.memory_space<vmem>>, vector<1x8x8xbf16>
    %43 = vector.shape_cast %42 : vector<1x8x8xbf16> to vector<8x8xbf16>
    %44 = arith.truncf %32 : vector<8x32xf32> to vector<8x32xbf16>
    %cst_14 = arith.constant dense<0.000000e+00> : vector<8x32xf32>
    %45 = tpu.matmul %43, %44, %cst_14 {dimension_numbers = #tpu.dot_dimension_numbers<[1], [0], [0], [1], [0, 0, 1, 1], [], []>} : vector<8x8xbf16>, vector<8x32xbf16>, vector<8x32xf32> -> vector<8x32xf32>
    %46 = arith.addf %41, %45 : vector<8x32xf32>
    %c0_15 = arith.constant 0 : index
    %c0_16 = arith.constant 0 : index
    %47 = vector.load %arg3[%c0_15, %c0_16] : memref<8x1xf32, #tpu.memory_space<vmem>>, vector<8x1xf32>
    %48 = vector.broadcast %47 : vector<8x1xf32> to vector<8x32xf32>
    %49 = arith.addf %46, %48 : vector<8x32xf32>
    %cst_17 = arith.constant 0.000000e+00 : f32
    %50 = vector.broadcast %cst_17 : f32 to vector<8x32xf32>
    %51 = arith.maximumf %49, %50 : vector<8x32xf32>
    %52 = vector.extract_strided_slice %51 {offsets = [0, 0], sizes = [8, 31], strides = [1, 1]} : vector<8x32xf32> to vector<8x31xf32>
    %53 = tpu.concatenate %26, %52 in 1 : vector<8x1xf32>, vector<8x31xf32> -> vector<8x32xf32>
    %54 = arith.mulf %53, %21 : vector<8x32xf32>
    %55 = vector.extract_strided_slice %51 {offsets = [0, 1], sizes = [8, 31], strides = [1, 1]} : vector<8x32xf32> to vector<8x31xf32>
    %56 = tpu.concatenate %55, %26 in 1 : vector<8x31xf32>, vector<8x1xf32> -> vector<8x32xf32>
    %57 = arith.mulf %56, %25 : vector<8x32xf32>
    %c0_18 = arith.constant 0 : index
    %c0_19 = arith.constant 0 : index
    %c0_20 = arith.constant 0 : index
    %58 = vector.load %arg4[%c0_18, %c0_19, %c0_20] : memref<3x4x8xbf16, #tpu.memory_space<vmem>>, vector<1x4x8xbf16>
    %59 = vector.shape_cast %58 : vector<1x4x8xbf16> to vector<4x8xbf16>
    %60 = arith.truncf %54 : vector<8x32xf32> to vector<8x32xbf16>
    %cst_21 = arith.constant dense<0.000000e+00> : vector<4x32xf32>
    %61 = tpu.matmul %59, %60, %cst_21 {dimension_numbers = #tpu.dot_dimension_numbers<[1], [0], [0], [1], [0, 0, 1, 1], [], []>} : vector<4x8xbf16>, vector<8x32xbf16>, vector<4x32xf32> -> vector<4x32xf32>
    %c1_22 = arith.constant 1 : index
    %c0_23 = arith.constant 0 : index
    %c0_24 = arith.constant 0 : index
    %62 = vector.load %arg4[%c1_22, %c0_23, %c0_24] : memref<3x4x8xbf16, #tpu.memory_space<vmem>>, vector<1x4x8xbf16>
    %63 = vector.shape_cast %62 : vector<1x4x8xbf16> to vector<4x8xbf16>
    %64 = arith.truncf %51 : vector<8x32xf32> to vector<8x32xbf16>
    %cst_25 = arith.constant dense<0.000000e+00> : vector<4x32xf32>
    %65 = tpu.matmul %63, %64, %cst_25 {dimension_numbers = #tpu.dot_dimension_numbers<[1], [0], [0], [1], [0, 0, 1, 1], [], []>} : vector<4x8xbf16>, vector<8x32xbf16>, vector<4x32xf32> -> vector<4x32xf32>
    %66 = arith.addf %61, %65 : vector<4x32xf32>
    %c2_26 = arith.constant 2 : index
    %c0_27 = arith.constant 0 : index
    %c0_28 = arith.constant 0 : index
    %67 = vector.load %arg4[%c2_26, %c0_27, %c0_28] : memref<3x4x8xbf16, #tpu.memory_space<vmem>>, vector<1x4x8xbf16>
    %68 = vector.shape_cast %67 : vector<1x4x8xbf16> to vector<4x8xbf16>
    %69 = arith.truncf %57 : vector<8x32xf32> to vector<8x32xbf16>
    %cst_29 = arith.constant dense<0.000000e+00> : vector<4x32xf32>
    %70 = tpu.matmul %68, %69, %cst_29 {dimension_numbers = #tpu.dot_dimension_numbers<[1], [0], [0], [1], [0, 0, 1, 1], [], []>} : vector<4x8xbf16>, vector<8x32xbf16>, vector<4x32xf32> -> vector<4x32xf32>
    %71 = arith.addf %66, %70 : vector<4x32xf32>
    %c0_30 = arith.constant 0 : index
    %c0_31 = arith.constant 0 : index
    %72 = vector.load %arg5[%c0_30, %c0_31] : memref<4x1xf32, #tpu.memory_space<vmem>>, vector<4x1xf32>
    %73 = vector.broadcast %72 : vector<4x1xf32> to vector<4x32xf32>
    %74 = arith.addf %71, %73 : vector<4x32xf32>
    %c0_32 = arith.constant 0 : index
    %c0_33 = arith.constant 0 : index
    %75 = vector.load %arg6[%c0_32, %c0_33] : memref<4x32xf32, #tpu.memory_space<vmem>>, vector<4x32xf32>
    tpu.vector_store %arg6[%c0_32, %c0_33], %74 {strides = array<i32>} : memref<4x32xf32, #tpu.memory_space<vmem>>, vector<4x32xf32>,
    return
  }
  func.func @transform_0(%arg0: i32) -> (i32, i32) {
    %c0_i32 = arith.constant 0 : i32
    %c0_i32_0 = arith.constant 0 : i32
    return %c0_i32, %arg0 : i32, i32
  }
  func.func @transform_1(%arg0: i32) -> (i32, i32, i32) {
    %c0_i32 = arith.constant 0 : i32
    %c0_i32_0 = arith.constant 0 : i32
    %c0_i32_1 = arith.constant 0 : i32
    %c0_i32_2 = arith.constant 0 : i32
    return %c0_i32, %c0_i32_0, %c0_i32_1 : i32, i32, i32
  }
  func.func @transform_2(%arg0: i32) -> (i32, i32) {
    %c0_i32 = arith.constant 0 : i32
    %c0_i32_0 = arith.constant 0 : i32
    %c0_i32_1 = arith.constant 0 : i32
    return %c0_i32, %c0_i32_0 : i32, i32
  }
  func.func @transform_3(%arg0: i32) -> (i32, i32, i32) {
    %c0_i32 = arith.constant 0 : i32
    %c0_i32_0 = arith.constant 0 : i32
    %c0_i32_1 = arith.constant 0 : i32
    %c0_i32_2 = arith.constant 0 : i32
    return %c0_i32, %c0_i32_0, %c0_i32_1 : i32, i32, i32
  }
  func.func @transform_4(%arg0: i32) -> (i32, i32) {
    %c0_i32 = arith.constant 0 : i32
    %c0_i32_0 = arith.constant 0 : i32
    %c0_i32_1 = arith.constant 0 : i32
    return %c0_i32, %c0_i32_0 : i32, i32
  }
  func.func @transform_5(%arg0: i32) -> (i32, i32) {
    %c0_i32 = arith.constant 0 : i32
    %c0_i32_0 = arith.constant 0 : i32
    return %c0_i32, %arg0 : i32, i32
  }
}

</mosaic_0001>

<llo_original>
// kernel: tpu_custom_call.1
$region0: #{tpu_custom_call.1}
  #allocation0 [shape = 'u32[]', space=smem, size = 0x4, offset = 0x4, fixed_abs, tag = 'smem constant byte address 0x4 - core index']
  #allocation1 [shape = 'u32[144,128]{1,0:T(1,128)}', space=vmem, size = 0x12000, scoped, tag = 'internal scratch']
  %s0 = inlined_call_operand.hbm [shape: f32[8,32], index: 0, kind: input, shape index: {}]
  %s1 = inlined_call_operand.vmem [shape: bf16[3,8,8], index: 1, kind: input, shape index: {}]
  %s2 = inlined_call_operand.vmem [shape: f32[8,1], index: 2, kind: input, shape index: {}]
  %s3 = inlined_call_operand.vmem [shape: bf16[3,4,8], index: 3, kind: input, shape index: {}]
  %s4 = inlined_call_operand.vmem [shape: f32[4,1], index: 4, kind: input, shape index: {}]
  %s5 = inlined_call_operand.hbm [shape: f32[4,32], index: 5, kind: output, shape index: {}]
  %s6 = sld [smem:[#allocation0]]
  $region34: #{tpu_custom_call.1} parent=0
    _
  %s8 = ssub.s32 1, %s6
  %s9 = scalar_select 0, %s8, %s6
  $region1: #{tpu_custom_call.1} parent=0
    #allocation2 [shape = 'u8[4096]{0}', space=vmem, size = 0x1000, scoped, tag = 'input window, operand 0, single buffered']
    #allocation3 [shape = 's32[1]{0}', space=sflag, size = 0x4, scoped, tag = 'scoped memory for tpu_custom_call.1']
    #allocation4 [shape = 's32[1]{0}', space=sflag, size = 0x4, scoped, tag = 'scoped memory for tpu_custom_call.1']
    #allocation5 [shape = 'u8[2048]{0}', space=vmem, size = 0x800, scoped, tag = 'output window, operand 0, single buffered']
    %10 = vsyncpa [#allocation3], 0
    %11 = vsyncpa [#allocation4], 0
    // Predicated region
    $region2: #{tpu_custom_call.1} parent=1 // pred_check
      _
    $region3: #{tpu_custom_call.1} parent=1 // pred_check_branch
      %13 = sbr.rel (0) target = $region5
    $region4: #{tpu_custom_call.1} parent=1 // pred_region
      %s15 = ssub.s32 128, 128
      %16 = vsyncadd [#allocation3], %s15
      %s18 = sshll.u32 [#allocation2], 4
      %s19 = int_to_ptr.vmem [resolvable:$true] %s18
      %21 = dma.hbm_to_vmem [thread:$0]  %s0, 128, %s19, [#allocation3]
    $region5: #{tpu_custom_call.1} parent=1 // pred_fallthru
      _
    // Predicated region
    $region6: #{tpu_custom_call.1} parent=1 // pred_check
      _
    $region7: #{tpu_custom_call.1} parent=1 // pred_check_branch
      %23 = sbr.rel (0) target = $region9
    $region8: #{tpu_custom_call.1} parent=1 // pred_region
      _
    $region9: #{tpu_custom_call.1} parent=1 // pred_fallthru
      _
    // Predicated region
    $region10: #{tpu_custom_call.1} parent=1 // pred_check
      _
    $region11: #{tpu_custom_call.1} parent=1 // pred_check_branch
      %25 = sbr.rel (0) target = $region13
    $region12: #{tpu_custom_call.1} parent=1 // pred_region
      _
    $region13: #{tpu_custom_call.1} parent=1 // pred_fallthru
      _
    // Predicated region
    $region14: #{tpu_custom_call.1} parent=1 // pred_check
      _
    $region15: #{tpu_custom_call.1} parent=1 // pred_check_branch
      %27 = sbr.rel (0) target = $region17
    $region16: #{tpu_custom_call.1} parent=1 // pred_region
      _
    $region17: #{tpu_custom_call.1} parent=1 // pred_fallthru
      _
    // Predicated region
    $region18: #{tpu_custom_call.1} parent=1 // pred_check
      _
    $region19: #{tpu_custom_call.1} parent=1 // pred_check_branch
      %29 = sbr.rel (0) target = $region21
    $region20: #{tpu_custom_call.1} parent=1 // pred_region
      _
    $region21: #{tpu_custom_call.1} parent=1 // pred_fallthru
      _
    // Predicated region
    $region22: #{tpu_custom_call.1} parent=1 // pred_check
      _
    $region23: #{tpu_custom_call.1} parent=1 // pred_check_branch
      %31 = sbr.rel (0) target = $region25
    $region24: #{tpu_custom_call.1} parent=1 // pred_region
      %32 = dma.done [#allocation3], 128
    $region25: #{tpu_custom_call.1} parent=1 // pred_fallthru
      _
    %v34 = vld [vmem:[#allocation2] sm:$0xff]
    %v35 = vlaneseq
    %v36 = vand.u32 %v35, 127
    %vm37 = vcmp.lt.s32.totalorder %v36, 0
    %v38 = vsub.s32 0, %v36
    %v39 = vsel %vm37, %v38, %v36
    %v40 = vshrl.u32 %v39, 4
    %v41 = vand.u32 %v39, 15
    %v42 = vsub.s32 0, %v41
    %v43 = vsel %vm37, %v42, %v41
    %vm44 = vcmp.ne.s32.totalorder %v43, 0
    %vm45 = vcmp.lt.s32.totalorder %v43, 0
    %vm46 = vmand %vm45, %vm44
    %v47 = vadd.s32 %v43, 16
    %v48 = vsel %vm46, %v47, %v43
    %vm49 = vcmp.ne.s32.totalorder %v48, 0
    %v50 = vsel %vm49, 1, 0
    %v51 = vcvt.s32.f32 %v50
    %vm52 = vcmp.ne.s32.totalorder %v48, 15
    %v53 = vsel %vm52, 1, 0
    %v54 = vcvt.s32.f32 %v53
    %56 = vrot.lane.b32.xlu0 %v34, 1
    %v57 = vpop.permute.xlu0 %56
    %vm59 = vcmask 7168
    %v60 = vsel %vm59, 0.0, %v57
    %v61 = vmul.f32 %v60, %v51
    %62 = vrot.lane.b32.xlu0 %v34, 127
    %v63 = vpop.permute.xlu0 %62
    %vm65 = vcmask 252928
    %v66 = vsel %vm65, %v63, 0.0
    %v67 = vmul.f32 %v66, %v54
    %v68 = vld [vmem:[%s1] sm:$0xf]
    %v69 = vpack.c.bf16 %v61, %v61
    %s70 = scalar_lea.vmem %s1, 4
    %v71 = vld [vmem:[%s70] sm:$0xf]
    %v72 = vpack.c.bf16 %v34, %v34
    %vm73 = vcmask 64512
    %v75 = vsel %vm73, %v71, 0
    %vm77 = vcmask 1043456
    %v79 = vsel %vm77, %v72, 0
    %81 = vmatprep.subr.bf16.mxu0 0
    %82 = vmatpush1.bf16.msra.mxu0 %v79
    %83 = vmatprep.subr.bf16.mxu0 0
    %84 = vmatpush1.bf16.msra.mxu0 0
    %85 = vmatprep.subr.bf16.mxu0 0
    %86 = vmatpush1.bf16.msra.mxu0 0
    %87 = vmatprep.subr.bf16.mxu0 0
    %88 = vmatpush1.bf16.msra.mxu0 0
    %89 = vmatprep.subr.bf16.mxu0 0
    %90 = vmatpush1.bf16.msra.mxu0 0
    %91 = vmatprep.subr.bf16.mxu0 0
    %92 = vmatpush1.bf16.msra.mxu0 0
    %93 = vmatprep.subr.bf16.mxu0 0
    %94 = vmatpush1.bf16.msra.mxu0 0
    %95 = vmatprep.subr.bf16.mxu0 0
    %96 = vmatpush1.bf16.msra.mxu0 0
    %97 = vmatprep.subr.bf16.mxu0 0
    %98 = vmatpush1.bf16.msra.mxu0 0
    %99 = vmatprep.subr.bf16.mxu0 0
    %100 = vmatpush1.bf16.msra.mxu0 0
    %101 = vmatprep.subr.bf16.mxu0 0
    %102 = vmatpush1.bf16.msra.mxu0 0
    %103 = vmatprep.subr.bf16.mxu0 0
    %104 = vmatpush1.bf16.msra.mxu0 0
    %105 = vmatprep.subr.bf16.mxu0 0
    %106 = vmatpush1.bf16.msra.mxu0 0
    %107 = vmatprep.subr.bf16.mxu0 0
    %108 = vmatpush1.bf16.msra.mxu0 0
    %109 = vmatprep.subr.bf16.mxu0 0
    %110 = vmatpush1.bf16.msra.mxu0 0
    %111 = vmatprep.subr.bf16.mxu0 0
    %112 = vmatpush1.bf16.msra.mxu0 0
    %113 = vmatprep.mubr.bf16.mxu0 0
    %114 = vmatmul.mubr.bf16.gmra.mrb[0].mxu0 %v75
    %v115 = vpop.f32.mrb[0].mxu0
    %v116 = vadd.f32 0.0, %v115
    %v117 = vpop.f32.mrb[0].mxu0
    %v118 = vpop.f32.mrb[0].mxu0
    %v119 = vpop.f32.mrb[0].mxu0
    %120 = vdwg.mxu0
    %v122 = vsel %vm73, %v68, 0
    %v125 = vsel %vm77, %v69, 0
    %127 = vmatprep.subr.bf16.mxu0 0
    %128 = vmatpush1.bf16.msra.mxu0 %v125
    %129 = vmatprep.subr.bf16.mxu0 0
    %130 = vmatpush1.bf16.msra.mxu0 0
    %131 = vmatprep.subr.bf16.mxu0 0
    %132 = vmatpush1.bf16.msra.mxu0 0
    %133 = vmatprep.subr.bf16.mxu0 0
    %134 = vmatpush1.bf16.msra.mxu0 0
    %135 = vmatprep.subr.bf16.mxu0 0
    %136 = vmatpush1.bf16.msra.mxu0 0
    %137 = vmatprep.subr.bf16.mxu0 0
    %138 = vmatpush1.bf16.msra.mxu0 0
    %139 = vmatprep.subr.bf16.mxu0 0
    %140 = vmatpush1.bf16.msra.mxu0 0
    %141 = vmatprep.subr.bf16.mxu0 0
    %142 = vmatpush1.bf16.msra.mxu0 0
    %143 = vmatprep.subr.bf16.mxu0 0
    %144 = vmatpush1.bf16.msra.mxu0 0
    %145 = vmatprep.subr.bf16.mxu0 0
    %146 = vmatpush1.bf16.msra.mxu0 0
    %147 = vmatprep.subr.bf16.mxu0 0
    %148 = vmatpush1.bf16.msra.mxu0 0
    %149 = vmatprep.subr.bf16.mxu0 0
    %150 = vmatpush1.bf16.msra.mxu0 0
    %151 = vmatprep.subr.bf16.mxu0 0
    %152 = vmatpush1.bf16.msra.mxu0 0
    %153 = vmatprep.subr.bf16.mxu0 0
    %154 = vmatpush1.bf16.msra.mxu0 0
    %155 = vmatprep.subr.bf16.mxu0 0
    %156 = vmatpush1.bf16.msra.mxu0 0
    %157 = vmatprep.subr.bf16.mxu0 0
    %158 = vmatpush1.bf16.msra.mxu0 0
    %159 = vmatprep.mubr.bf16.mxu0 0
    %160 = vmatmul.mubr.bf16.gmra.mrb[0].mxu0 %v122
    %v161 = vpop.f32.mrb[0].mxu0
    %v162 = vadd.f32 %v116, %v161
    %v163 = vpop.f32.mrb[0].mxu0
    %v164 = vpop.f32.mrb[0].mxu0
    %v165 = vpop.f32.mrb[0].mxu0
    %166 = vdwg.mxu0
    %s167 = scalar_lea.vmem %s1, 8
    %v168 = vld [vmem:[%s167] sm:$0xf]
    %v169 = vpack.c.bf16 %v67, %v67
    %v171 = vsel %vm73, %v168, 0
    %v174 = vsel %vm77, %v169, 0
    %176 = vmatprep.subr.bf16.mxu0 0
    %177 = vmatpush1.bf16.msra.mxu0 %v174
    %178 = vmatprep.subr.bf16.mxu0 0
    %179 = vmatpush1.bf16.msra.mxu0 0
    %180 = vmatprep.subr.bf16.mxu0 0
    %181 = vmatpush1.bf16.msra.mxu0 0
    %182 = vmatprep.subr.bf16.mxu0 0
    %183 = vmatpush1.bf16.msra.mxu0 0
    %184 = vmatprep.subr.bf16.mxu0 0
    %185 = vmatpush1.bf16.msra.mxu0 0
    %186 = vmatprep.subr.bf16.mxu0 0
    %187 = vmatpush1.bf16.msra.mxu0 0
    %188 = vmatprep.subr.bf16.mxu0 0
    %189 = vmatpush1.bf16.msra.mxu0 0
    %190 = vmatprep.subr.bf16.mxu0 0
    %191 = vmatpush1.bf16.msra.mxu0 0
    %192 = vmatprep.subr.bf16.mxu0 0
    %193 = vmatpush1.bf16.msra.mxu0 0
    %194 = vmatprep.subr.bf16.mxu0 0
    %195 = vmatpush1.bf16.msra.mxu0 0
    %196 = vmatprep.subr.bf16.mxu0 0
    %197 = vmatpush1.bf16.msra.mxu0 0
    %198 = vmatprep.subr.bf16.mxu0 0
    %199 = vmatpush1.bf16.msra.mxu0 0
    %200 = vmatprep.subr.bf16.mxu0 0
    %201 = vmatpush1.bf16.msra.mxu0 0
    %202 = vmatprep.subr.bf16.mxu0 0
    %203 = vmatpush1.bf16.msra.mxu0 0
    %204 = vmatprep.subr.bf16.mxu0 0
    %205 = vmatpush1.bf16.msra.mxu0 0
    %206 = vmatprep.subr.bf16.mxu0 0
    %207 = vmatpush1.bf16.msra.mxu0 0
    %208 = vmatprep.mubr.bf16.mxu0 0
    %209 = vmatmul.mubr.bf16.gmra.mrb[0].mxu0 %v171
    %v210 = vpop.f32.mrb[0].mxu0
    %v211 = vadd.f32 0.0, %v210
    %v212 = vpop.f32.mrb[0].mxu0
    %v213 = vpop.f32.mrb[0].mxu0
    %v214 = vpop.f32.mrb[0].mxu0
    %215 = vdwg.mxu0
    %v216 = vadd.f32 %v162, %v211
    %v217 = vld [vmem:[%s2] sm:$0xff]
    %219 = vset.pattern.permute.xlu0 0
    %220 = vperm.xlu0 %219, %v217
    %v221 = vpop.permute.xlu0 %220
    %v223 = vadd.f32 %v216, %v221
    %v224 = vmax.f32 %v223, 0.0
    %226 = vrot.lane.b32.xlu0 %v224, 1
    %v227 = vpop.permute.xlu0 %226
    %v229 = vsel %vm59, 0.0, %v227
    %v230 = vmul.f32 %v229, %v51
    %231 = vrot.lane.b32.xlu0 %v224, 127
    %v232 = vpop.permute.xlu0 %231
    %v234 = vsel %vm65, %v232, 0.0
    %v235 = vmul.f32 %v234, %v54
    %v236 = vld [vmem:[%s3] sm:$0x3]
    %v237 = vpack.c.bf16 %v230, %v230
    %s238 = scalar_lea.vmem %s3, 2
    %v239 = vld [vmem:[%s238] sm:$0x3]
    %v240 = vpack.c.bf16 %v224, %v224
    %v242 = vsel %vm73, %v239, 0
    %v245 = vsel %vm77, %v240, 0
    %247 = vmatprep.subr.bf16.mxu0 0
    %248 = vmatpush1.bf16.msra.mxu0 %v245
    %249 = vmatprep.subr.bf16.mxu0 0
    %250 = vmatpush1.bf16.msra.mxu0 0
    %251 = vmatprep.subr.bf16.mxu0 0
    %252 = vmatpush1.bf16.msra.mxu0 0
    %253 = vmatprep.subr.bf16.mxu0 0
    %254 = vmatpush1.bf16.msra.mxu0 0
    %255 = vmatprep.subr.bf16.mxu0 0
    %256 = vmatpush1.bf16.msra.mxu0 0
    %257 = vmatprep.subr.bf16.mxu0 0
    %258 = vmatpush1.bf16.msra.mxu0 0
    %259 = vmatprep.subr.bf16.mxu0 0
    %260 = vmatpush1.bf16.msra.mxu0 0
    %261 = vmatprep.subr.bf16.mxu0 0
    %262 = vmatpush1.bf16.msra.mxu0 0
    %263 = vmatprep.subr.bf16.mxu0 0
    %264 = vmatpush1.bf16.msra.mxu0 0
    %265 = vmatprep.subr.bf16.mxu0 0
    %266 = vmatpush1.bf16.msra.mxu0 0
    %267 = vmatprep.subr.bf16.mxu0 0
    %268 = vmatpush1.bf16.msra.mxu0 0
    %269 = vmatprep.subr.bf16.mxu0 0
    %270 = vmatpush1.bf16.msra.mxu0 0
    %271 = vmatprep.subr.bf16.mxu0 0
    %272 = vmatpush1.bf16.msra.mxu0 0
    %273 = vmatprep.subr.bf16.mxu0 0
    %274 = vmatpush1.bf16.msra.mxu0 0
    %275 = vmatprep.subr.bf16.mxu0 0
    %276 = vmatpush1.bf16.msra.mxu0 0
    %277 = vmatprep.subr.bf16.mxu0 0
    %278 = vmatpush1.bf16.msra.mxu0 0
    %279 = vmatprep.mubr.bf16.mxu0 0
    %280 = vmatmul.mubr.bf16.gmra.mrb[0].mxu0 %v242
    %v281 = vpop.f32.mrb[0].mxu0
    %v282 = vadd.f32 0.0, %v281
    %v283 = vpop.f32.mrb[0].mxu0
    %v284 = vpop.f32.mrb[0].mxu0
    %v285 = vpop.f32.mrb[0].mxu0
    %286 = vdwg.mxu0
    %v288 = vsel %vm73, %v236, 0
    %v291 = vsel %vm77, %v237, 0
    %293 = vmatprep.subr.bf16.mxu0 0
    %294 = vmatpush1.bf16.msra.mxu0 %v291
    %295 = vmatprep.subr.bf16.mxu0 0
    %296 = vmatpush1.bf16.msra.mxu0 0
    %297 = vmatprep.subr.bf16.mxu0 0
    %298 = vmatpush1.bf16.msra.mxu0 0
    %299 = vmatprep.subr.bf16.mxu0 0
    %300 = vmatpush1.bf16.msra.mxu0 0
    %301 = vmatprep.subr.bf16.mxu0 0
    %302 = vmatpush1.bf16.msra.mxu0 0
    %303 = vmatprep.subr.bf16.mxu0 0
    %304 = vmatpush1.bf16.msra.mxu0 0
    %305 = vmatprep.subr.bf16.mxu0 0
    %306 = vmatpush1.bf16.msra.mxu0 0
    %307 = vmatprep.subr.bf16.mxu0 0
    %308 = vmatpush1.bf16.msra.mxu0 0
    %309 = vmatprep.subr.bf16.mxu0 0
    %310 = vmatpush1.bf16.msra.mxu0 0
    %311 = vmatprep.subr.bf16.mxu0 0
    %312 = vmatpush1.bf16.msra.mxu0 0
    %313 = vmatprep.subr.bf16.mxu0 0
    %314 = vmatpush1.bf16.msra.mxu0 0
    %315 = vmatprep.subr.bf16.mxu0 0
    %316 = vmatpush1.bf16.msra.mxu0 0
    %317 = vmatprep.subr.bf16.mxu0 0
    %318 = vmatpush1.bf16.msra.mxu0 0
    %319 = vmatprep.subr.bf16.mxu0 0
    %320 = vmatpush1.bf16.msra.mxu0 0
    %321 = vmatprep.subr.bf16.mxu0 0
    %322 = vmatpush1.bf16.msra.mxu0 0
    %323 = vmatprep.subr.bf16.mxu0 0
    %324 = vmatpush1.bf16.msra.mxu0 0
    %325 = vmatprep.mubr.bf16.mxu0 0
    %326 = vmatmul.mubr.bf16.gmra.mrb[0].mxu0 %v288
    %v327 = vpop.f32.mrb[0].mxu0
    %v328 = vadd.f32 %v282, %v327
    %v329 = vpop.f32.mrb[0].mxu0
    %v330 = vpop.f32.mrb[0].mxu0
    %v331 = vpop.f32.mrb[0].mxu0
    %332 = vdwg.mxu0
    %s333 = scalar_lea.vmem %s3, 4
    %v334 = vld [vmem:[%s333] sm:$0x3]
    %v335 = vpack.c.bf16 %v235, %v235
    %v337 = vsel %vm73, %v334, 0
    %v340 = vsel %vm77, %v335, 0
    %342 = vmatprep.subr.bf16.mxu0 0
    %343 = vmatpush1.bf16.msra.mxu0 %v340
    %344 = vmatprep.subr.bf16.mxu0 0
    %345 = vmatpush1.bf16.msra.mxu0 0
    %346 = vmatprep.subr.bf16.mxu0 0
    %347 = vmatpush1.bf16.msra.mxu0 0
    %348 = vmatprep.subr.bf16.mxu0 0
    %349 = vmatpush1.bf16.msra.mxu0 0
    %350 = vmatprep.subr.bf16.mxu0 0
    %351 = vmatpush1.bf16.msra.mxu0 0
    %352 = vmatprep.subr.bf16.mxu0 0
    %353 = vmatpush1.bf16.msra.mxu0 0
    %354 = vmatprep.subr.bf16.mxu0 0
    %355 = vmatpush1.bf16.msra.mxu0 0
    %356 = vmatprep.subr.bf16.mxu0 0
    %357 = vmatpush1.bf16.msra.mxu0 0
    %358 = vmatprep.subr.bf16.mxu0 0
    %359 = vmatpush1.bf16.msra.mxu0 0
    %360 = vmatprep.subr.bf16.mxu0 0
    %361 = vmatpush1.bf16.msra.mxu0 0
    %362 = vmatprep.subr.bf16.mxu0 0
    %363 = vmatpush1.bf16.msra.mxu0 0
    %364 = vmatprep.subr.bf16.mxu0 0
    %365 = vmatpush1.bf16.msra.mxu0 0
    %366 = vmatprep.subr.bf16.mxu0 0
    %367 = vmatpush1.bf16.msra.mxu0 0
    %368 = vmatprep.subr.bf16.mxu0 0
    %369 = vmatpush1.bf16.msra.mxu0 0
    %370 = vmatprep.subr.bf16.mxu0 0
    %371 = vmatpush1.bf16.msra.mxu0 0
    %372 = vmatprep.subr.bf16.mxu0 0
    %373 = vmatpush1.bf16.msra.mxu0 0
    %374 = vmatprep.mubr.bf16.mxu0 0
    %375 = vmatmul.mubr.bf16.gmra.mrb[0].mxu0 %v337
    %v376 = vpop.f32.mrb[0].mxu0
    %v377 = vadd.f32 0.0, %v376
    %v378 = vpop.f32.mrb[0].mxu0
    %v379 = vpop.f32.mrb[0].mxu0
    %v380 = vpop.f32.mrb[0].mxu0
    %381 = vdwg.mxu0
    %v382 = vadd.f32 %v328, %v377
    %v383 = vld [vmem:[%s4] sm:$0xf]
    %385 = vset.pattern.permute.xlu0 0
    %386 = vperm.xlu0 %385, %v383
    %v387 = vpop.permute.xlu0 %386
    %v389 = vadd.f32 %v382, %v387
    %vm390 = vcmask 257024
    %391 = vst.msk [vmem:[#allocation5] sm:$0xf] %vm390, %v389
    // Predicated region
    $region26: #{tpu_custom_call.1} parent=1 // pred_check
      _
    $region27: #{tpu_custom_call.1} parent=1 // pred_check_branch
      %393 = sbr.rel (0) target = $region29
    $region28: #{tpu_custom_call.1} parent=1 // pred_region
      %s395 = ssub.s32 64, 64
      %396 = vsyncadd [#allocation4], %s395
      %s398 = sshll.u32 [#allocation5], 4
      %s399 = int_to_ptr.vmem [resolvable:$true] %s398
      %401 = dma.vmem_to_hbm [thread:$0]  %s399, 64, %s5, [#allocation4]
    $region29: #{tpu_custom_call.1} parent=1 // pred_fallthru
      _
    // Predicated region
    $region30: #{tpu_custom_call.1} parent=1 // pred_check
      _
    $region31: #{tpu_custom_call.1} parent=1 // pred_check_branch
      %403 = sbr.rel (0) target = $region33
    $region32: #{tpu_custom_call.1} parent=1 // pred_region
      %404 = dma.done [#allocation4], 64
    $region33: #{tpu_custom_call.1} parent=1 // pred_fallthru
      _
    %405 = vsyncpa [#allocation3], 1
    %406 = vsyncpa [#allocation4], 1

</llo_original>
